<compile_context>
chip_gen: v7x
topology: tpu7x:2x2x1
jax: 0.10.0
libtpu: 0.0.40
codegen_flags: <defaults>
</compile_context>

<pallas_src>
import jax
import jax.numpy as jnp
import numpy as np
from jax.experimental import pallas as pl
from jax.experimental.pallas import tpu as pltpu


# Winograd F(2x2,3x3) filter-transform matrix (same 4x3 G as the reference).
# The data transform B^T (rows [1,0,-1,0],[0,1,1,0],[0,-1,1,0],[0,1,0,-1]) and
# the inverse transform A^T (rows [1,1,1,0],[0,1,-1,-1]) have 0/+-1 entries and
# are hand-expanded as adds/subs inside the kernel.
_G = jnp.array([[1.,   0.,  0.],
                [0.5,  0.5, 0.5],
                [0.5, -0.5, 0.5],
                [0.,   0.,  1.]], dtype=jnp.float32)


def _make_winograd_kernel(nW, C, K):
    """Fused kernel for one (batch, tile-row): extraction + B^T d B + GEMM + A^T M A + bias."""

    def kernel(xt_ref, xb_ref, u_ref, b_ref, o_ref):
        # xt_ref / xb_ref blocks: (1, 1, 4, W2, C) holding row-pairs t and t+1.
        # Layout: xp[b, rp, q, cp, c] = x[b, c, 2*rp + q//2, 2*cp + q%2].
        top = xt_ref[0, 0]          # (4, W2, C) -> input rows 2t, 2t+1
        bot = xb_ref[0, 0]          # (4, W2, C) -> input rows 2t+2, 2t+3

        def plane(A, Bc):
            # plane[j, c] = x[b, c, 2t + A, 2j + Bc], shape (nW, C)
            src = top if A < 2 else bot
            q = 2 * (A % 2) + (Bc % 2)
            s = Bc // 2
            return src[q, s:s + nW, :]

        # ---- data transform V = B^T d B (f32 on the VPU) ----
        r = [[None] * 4 for _ in range(4)]
        for Bc in range(4):
            p0, p1, p2, p3 = plane(0, Bc), plane(1, Bc), plane(2, Bc), plane(3, Bc)
            r[0][Bc] = p0 - p2
            r[1][Bc] = p1 + p2
            r[2][Bc] = p2 - p1
            r[3][Bc] = p1 - p3
        v = [[None] * 4 for _ in range(4)]
        for gi in range(4):
            r0, r1, r2, r3 = r[gi]
            v[gi][0] = r0 - r2
            v[gi][1] = r1 + r2
            v[gi][2] = r2 - r1
            v[gi][3] = r1 - r3

        # ---- fold the 16 Winograd points into one lane-dense MXU GEMM ----
        #   (nW, 16*C) @ block_diag(U_g) (16*C, 16*K) -> (nW, 16*K), f32 accum
        v_cat = jnp.concatenate(
            [v[gi][gj] for gi in range(4) for gj in range(4)],
            axis=-1).astype(jnp.bfloat16)
        m_cat = jnp.dot(v_cat, u_ref[...], preferred_element_type=jnp.float32)

        def m(gi, gj):
            g = 4 * gi + gj
            return m_cat[:, g * K:(g + 1) * K]          # (nW, K)

        # ---- inverse transform Y = A^T M A + bias ----
        bias = b_ref[...]                               # (1, K), broadcasts
        s0 = [m(0, gj) + m(1, gj) + m(2, gj) for gj in range(4)]
        s1 = [m(1, gj) - m(2, gj) - m(3, gj) for gj in range(4)]
        o_ref[0, 0, 0, 0] = s0[0] + s0[1] + s0[2] + bias
        o_ref[0, 0, 0, 1] = s0[1] - s0[2] - s0[3] + bias
        o_ref[0, 0, 1, 0] = s1[0] + s1[1] + s1[2] + bias
        o_ref[0, 0, 1, 1] = s1[1] - s1[2] - s1[3] + bias

    return kernel


def winograd_conv2d(x, weight, bias):
    B, C, H, W = x.shape
    K = weight.shape[0]
    assert H % 2 == 0 and W % 2 == 0 and H >= 4 and W >= 4
    H2, W2 = H // 2, W // 2
    nH, nW = H2 - 1, W2 - 1

    # Cheap layout prep (pure reshape/transpose, no gather):
    #   xp[b, rp, q, cp, c] = x[b, c, 2*rp + q//2, 2*cp + q%2]
    xp = x.reshape(B, C, H2, 2, W2, 2).transpose(0, 2, 3, 5, 4, 1)
    xp = xp.reshape(B, H2, 4, W2, C)

    # Filter transform U_g = G w G^T, folded into a block-diagonal (16C, 16K)
    # matrix so the 16 Winograd points become one lane-dense MXU contraction.
    u16 = jnp.einsum('xi,kcij,yj->xyck', _G, weight, _G).reshape(16, C, K)
    u_bd = (jnp.eye(16, dtype=u16.dtype)[:, None, :, None]
            * u16[:, :, None, :]).reshape(16 * C, 16 * K).astype(jnp.bfloat16)

    bias2d = bias.reshape(1, K).astype(jnp.float32)

    yk = pl.pallas_call(
        _make_winograd_kernel(nW, C, K),
        out_shape=jax.ShapeDtypeStruct((B, nH, 2, 2, nW, K), jnp.float32),
        grid=(B, nH),
        in_specs=[
            # same array twice: row-pairs t (rows 2t,2t+1) and t+1 (rows 2t+2,2t+3)
            pl.BlockSpec((1, 1, 4, W2, C), lambda b, t: (b, t, 0, 0, 0)),
            pl.BlockSpec((1, 1, 4, W2, C), lambda b, t: (b, t + 1, 0, 0, 0)),
            # block-diagonal transformed filter: full extent, constant map -> VMEM resident
            pl.BlockSpec((16 * C, 16 * K), lambda b, t: (0, 0)),
            # bias: full extent, constant map -> VMEM resident
            pl.BlockSpec((1, K), lambda b, t: (0, 0)),
        ],
        out_specs=pl.BlockSpec((1, 1, 2, 2, nW, K),
                               lambda b, t: (b, t, 0, 0, 0, 0)),
        compiler_params=pltpu.CompilerParams(
            dimension_semantics=("parallel", "parallel"),
            vmem_limit_bytes=32 * 1024 * 1024),
    )(xp, xp, u_bd, bias2d)

    # Reassemble NCHW output: (B, nH, oi, oj, nW, K) -> (B, K, H-2, W-2).
    y = yk.transpose(0, 5, 1, 2, 4, 3).reshape(B, K, H - 2, W - 2)
    return y
    # TODO(synk): the reference's trailing .view(-1, B, H//2, W//2).sum(0) is
    # shape-inconsistent (the PyTorch code cannot execute); we return the
    # intended conv output (B, K, H-2, W-2) instead.


if __name__ == "__main__":
    key = jax.random.PRNGKey(0)
    kx, kw, kb = jax.random.split(key, 3)

    B, C, K, H, W = 2, 4, 8, 16, 16          # small shapes consistent with the module
    x = jax.random.normal(kx, (B, C, H, W), dtype=jnp.float32)
    weight = jax.random.normal(kw, (K, C, 3, 3), dtype=jnp.float32) * 0.1
    bias = jax.random.normal(kb, (K,), dtype=jnp.float32) * 0.1

    out = jax.jit(winograd_conv2d)(x, weight, bias)
    out = jax.block_until_ready(out)

    # reference: direct 3x3 valid conv (what the wrapped nn.Conv2d computes)
    ref = jax.lax.conv_general_dilated(
        x, weight, window_strides=(1, 1), padding='VALID',
        dimension_numbers=('NCHW', 'OIHW', 'NCHW')) + bias[None, :, None, None]

    assert out.shape == (B, K, H - 2, W - 2)
    # bf16 MXU operands (f32 accumulation) + Winograd => loosened tolerance,
    # as recommended in the performance review.
    np.testing.assert_allclose(np.asarray(out), np.asarray(ref), rtol=2e-2, atol=5e-2)
    print("KERNEL_OK")
</pallas_src>

<mosaic_0001>
module attributes {stable_mosaic.version = 11 : i64} {
  func.func @kernel(%arg0: i32, %arg1: i32, %arg2: memref<1x1x4x8x4xf32, #tpu.memory_space<vmem>>, %arg3: memref<1x1x4x8x4xf32, #tpu.memory_space<vmem>>, %arg4: memref<64x128xbf16, #tpu.memory_space<vmem>>, %arg5: memref<1x8xf32, #tpu.memory_space<vmem>>, %arg6: memref<1x1x2x2x7x8xf32, #tpu.memory_space<vmem>>) attributes {dimension_semantics = [#tpu.dimension_semantics<parallel>, #tpu.dimension_semantics<parallel>], iteration_bounds = array<i64: 2, 7>, scalar_prefetch = 0 : i64, scratch_operands = 0 : i64, tpu.core_type = #tpu.core_type<tc>, window_params = [{transform_indices = @transform_0, window_bounds = array<i64: 1, 1, 4, 8, 4>}, {transform_indices = @transform_1, window_bounds = array<i64: 1, 1, 4, 8, 4>}, {pipeline_mode = #tpu.pipeline_mode<synchronous>, transform_indices = @transform_2, window_bounds = array<i64: 64, 128>}, {pipeline_mode = #tpu.pipeline_mode<synchronous>, transform_indices = @transform_3, window_bounds = array<i64: 1, 8>}, {transform_indices = @transform_4, window_bounds = array<i64: 1, 1, 2, 2, 7, 8>}]} {
    %c0 = arith.constant 0 : index
    %c0_0 = arith.constant 0 : index
    %c0_1 = arith.constant 0 : index
    %c0_2 = arith.constant 0 : index
    %c0_3 = arith.constant 0 : index
    %0 = vector.load %arg2[%c0, %c0_0, %c0_1, %c0_2, %c0_3] : memref<1x1x4x8x4xf32, #tpu.memory_space<vmem>>, vector<1x1x4x8x4xf32>
    %1 = vector.shape_cast %0 : vector<1x1x4x8x4xf32> to vector<4x8x4xf32>
    %c0_4 = arith.constant 0 : index
    %c0_5 = arith.constant 0 : index
    %c0_6 = arith.constant 0 : index
    %c0_7 = arith.constant 0 : index
    %c0_8 = arith.constant 0 : index
    %2 = vector.load %arg3[%c0_4, %c0_5, %c0_6, %c0_7, %c0_8] : memref<1x1x4x8x4xf32, #tpu.memory_space<vmem>>, vector<1x1x4x8x4xf32>
    %3 = vector.shape_cast %2 : vector<1x1x4x8x4xf32> to vector<4x8x4xf32>
    %4 = vector.extract_strided_slice %1 {offsets = [0, 0, 0], sizes = [1, 7, 4], strides = [1, 1, 1]} : vector<4x8x4xf32> to vector<1x7x4xf32>
    %5 = vector.shape_cast %4 : vector<1x7x4xf32> to vector<7x4xf32>
    %6 = vector.extract_strided_slice %1 {offsets = [2, 0, 0], sizes = [1, 7, 4], strides = [1, 1, 1]} : vector<4x8x4xf32> to vector<1x7x4xf32>
    %7 = vector.shape_cast %6 : vector<1x7x4xf32> to vector<7x4xf32>
    %8 = vector.extract_strided_slice %3 {offsets = [0, 0, 0], sizes = [1, 7, 4], strides = [1, 1, 1]} : vector<4x8x4xf32> to vector<1x7x4xf32>
    %9 = vector.shape_cast %8 : vector<1x7x4xf32> to vector<7x4xf32>
    %10 = vector.extract_strided_slice %3 {offsets = [2, 0, 0], sizes = [1, 7, 4], strides = [1, 1, 1]} : vector<4x8x4xf32> to vector<1x7x4xf32>
    %11 = vector.shape_cast %10 : vector<1x7x4xf32> to vector<7x4xf32>
    %12 = arith.subf %5, %9 : vector<7x4xf32>
    %13 = arith.addf %7, %9 : vector<7x4xf32>
    %14 = arith.subf %9, %7 : vector<7x4xf32>
    %15 = arith.subf %7, %11 : vector<7x4xf32>
    %16 = vector.extract_strided_slice %1 {offsets = [1, 0, 0], sizes = [1, 7, 4], strides = [1, 1, 1]} : vector<4x8x4xf32> to vector<1x7x4xf32>
    %17 = vector.shape_cast %16 : vector<1x7x4xf32> to vector<7x4xf32>
    %18 = vector.extract_strided_slice %1 {offsets = [3, 0, 0], sizes = [1, 7, 4], strides = [1, 1, 1]} : vector<4x8x4xf32> to vector<1x7x4xf32>
    %19 = vector.shape_cast %18 : vector<1x7x4xf32> to vector<7x4xf32>
    %20 = vector.extract_strided_slice %3 {offsets = [1, 0, 0], sizes = [1, 7, 4], strides = [1, 1, 1]} : vector<4x8x4xf32> to vector<1x7x4xf32>
    %21 = vector.shape_cast %20 : vector<1x7x4xf32> to vector<7x4xf32>
    %22 = vector.extract_strided_slice %3 {offsets = [3, 0, 0], sizes = [1, 7, 4], strides = [1, 1, 1]} : vector<4x8x4xf32> to vector<1x7x4xf32>
    %23 = vector.shape_cast %22 : vector<1x7x4xf32> to vector<7x4xf32>
    %24 = arith.subf %17, %21 : vector<7x4xf32>
    %25 = arith.addf %19, %21 : vector<7x4xf32>
    %26 = arith.subf %21, %19 : vector<7x4xf32>
    %27 = arith.subf %19, %23 : vector<7x4xf32>
    %28 = vector.extract_strided_slice %1 {offsets = [0, 1, 0], sizes = [1, 7, 4], strides = [1, 1, 1]} : vector<4x8x4xf32> to vector<1x7x4xf32>
    %29 = vector.shape_cast %28 : vector<1x7x4xf32> to vector<7x4xf32>
    %30 = vector.extract_strided_slice %1 {offsets = [2, 1, 0], sizes = [1, 7, 4], strides = [1, 1, 1]} : vector<4x8x4xf32> to vector<1x7x4xf32>
    %31 = vector.shape_cast %30 : vector<1x7x4xf32> to vector<7x4xf32>
    %32 = vector.extract_strided_slice %3 {offsets = [0, 1, 0], sizes = [1, 7, 4], strides = [1, 1, 1]} : vector<4x8x4xf32> to vector<1x7x4xf32>
    %33 = vector.shape_cast %32 : vector<1x7x4xf32> to vector<7x4xf32>
    %34 = vector.extract_strided_slice %3 {offsets = [2, 1, 0], sizes = [1, 7, 4], strides = [1, 1, 1]} : vector<4x8x4xf32> to vector<1x7x4xf32>
    %35 = vector.shape_cast %34 : vector<1x7x4xf32> to vector<7x4xf32>
    %36 = arith.subf %29, %33 : vector<7x4xf32>
    %37 = arith.addf %31, %33 : vector<7x4xf32>
    %38 = arith.subf %33, %31 : vector<7x4xf32>
    %39 = arith.subf %31, %35 : vector<7x4xf32>
    %40 = vector.extract_strided_slice %1 {offsets = [1, 1, 0], sizes = [1, 7, 4], strides = [1, 1, 1]} : vector<4x8x4xf32> to vector<1x7x4xf32>
    %41 = vector.shape_cast %40 : vector<1x7x4xf32> to vector<7x4xf32>
    %42 = vector.extract_strided_slice %1 {offsets = [3, 1, 0], sizes = [1, 7, 4], strides = [1, 1, 1]} : vector<4x8x4xf32> to vector<1x7x4xf32>
    %43 = vector.shape_cast %42 : vector<1x7x4xf32> to vector<7x4xf32>
    %44 = vector.extract_strided_slice %3 {offsets = [1, 1, 0], sizes = [1, 7, 4], strides = [1, 1, 1]} : vector<4x8x4xf32> to vector<1x7x4xf32>
    %45 = vector.shape_cast %44 : vector<1x7x4xf32> to vector<7x4xf32>
    %46 = vector.extract_strided_slice %3 {offsets = [3, 1, 0], sizes = [1, 7, 4], strides = [1, 1, 1]} : vector<4x8x4xf32> to vector<1x7x4xf32>
    %47 = vector.shape_cast %46 : vector<1x7x4xf32> to vector<7x4xf32>
    %48 = arith.subf %41, %45 : vector<7x4xf32>
    %49 = arith.addf %43, %45 : vector<7x4xf32>
    %50 = arith.subf %45, %43 : vector<7x4xf32>
    %51 = arith.subf %43, %47 : vector<7x4xf32>
    %52 = arith.subf %12, %36 : vector<7x4xf32>
    %53 = arith.addf %24, %36 : vector<7x4xf32>
    %54 = arith.subf %36, %24 : vector<7x4xf32>
    %55 = arith.subf %24, %48 : vector<7x4xf32>
    %56 = arith.subf %13, %37 : vector<7x4xf32>
    %57 = arith.addf %25, %37 : vector<7x4xf32>
    %58 = arith.subf %37, %25 : vector<7x4xf32>
    %59 = arith.subf %25, %49 : vector<7x4xf32>
    %60 = arith.subf %14, %38 : vector<7x4xf32>
    %61 = arith.addf %26, %38 : vector<7x4xf32>
    %62 = arith.subf %38, %26 : vector<7x4xf32>
    %63 = arith.subf %26, %50 : vector<7x4xf32>
    %64 = arith.subf %15, %39 : vector<7x4xf32>
    %65 = arith.addf %27, %39 : vector<7x4xf32>
    %66 = arith.subf %39, %27 : vector<7x4xf32>
    %67 = arith.subf %27, %51 : vector<7x4xf32>
    %68 = tpu.concatenate %52, %53, %54, %55, %56, %57, %58, %59, %60, %61, %62, %63, %64, %65, %66, %67 in 1 : vector<7x4xf32>, vector<7x4xf32>, vector<7x4xf32>, vector<7x4xf32>, vector<7x4xf32>, vector<7x4xf32>, vector<7x4xf32>, vector<7x4xf32>, vector<7x4xf32>, vector<7x4xf32>, vector<7x4xf32>, vector<7x4xf32>, vector<7x4xf32>, vector<7x4xf32>, vector<7x4xf32>, vector<7x4xf32> -> vector<7x64xf32>
    %69 = arith.truncf %68 : vector<7x64xf32> to vector<7x64xbf16>
    %c0_9 = arith.constant 0 : index
    %c0_10 = arith.constant 0 : index
    %70 = vector.load %arg4[%c0_9, %c0_10] : memref<64x128xbf16, #tpu.memory_space<vmem>>, vector<64x128xbf16>
    %cst = arith.constant dense<0.000000e+00> : vector<7x128xf32>
    %71 = tpu.matmul %69, %70, %cst {dimension_numbers = #tpu.dot_dimension_numbers<[1], [0], [0], [1], [0, 0, 1, 1], [], []>} : vector<7x64xbf16>, vector<64x128xbf16>, vector<7x128xf32> -> vector<7x128xf32>
    %c0_11 = arith.constant 0 : index
    %c0_12 = arith.constant 0 : index
    %72 = vector.load %arg5[%c0_11, %c0_12] : memref<1x8xf32, #tpu.memory_space<vmem>>, vector<1x8xf32>
    %73 = vector.extract_strided_slice %71 {offsets = [0, 0], sizes = [7, 8], strides = [1, 1]} : vector<7x128xf32> to vector<7x8xf32>
    %74 = vector.extract_strided_slice %71 {offsets = [0, 32], sizes = [7, 8], strides = [1, 1]} : vector<7x128xf32> to vector<7x8xf32>
    %75 = arith.addf %73, %74 : vector<7x8xf32>
    %76 = vector.extract_strided_slice %71 {offsets = [0, 64], sizes = [7, 8], strides = [1, 1]} : vector<7x128xf32> to vector<7x8xf32>
    %77 = arith.addf %75, %76 : vector<7x8xf32>
    %78 = vector.extract_strided_slice %71 {offsets = [0, 8], sizes = [7, 8], strides = [1, 1]} : vector<7x128xf32> to vector<7x8xf32>
    %79 = vector.extract_strided_slice %71 {offsets = [0, 40], sizes = [7, 8], strides = [1, 1]} : vector<7x128xf32> to vector<7x8xf32>
    %80 = arith.addf %78, %79 : vector<7x8xf32>
    %81 = vector.extract_strided_slice %71 {offsets = [0, 72], sizes = [7, 8], strides = [1, 1]} : vector<7x128xf32> to vector<7x8xf32>
    %82 = arith.addf %80, %81 : vector<7x8xf32>
    %83 = vector.extract_strided_slice %71 {offsets = [0, 16], sizes = [7, 8], strides = [1, 1]} : vector<7x128xf32> to vector<7x8xf32>
    %84 = vector.extract_strided_slice %71 {offsets = [0, 48], sizes = [7, 8], strides = [1, 1]} : vector<7x128xf32> to vector<7x8xf32>
    %85 = arith.addf %83, %84 : vector<7x8xf32>
    %86 = vector.extract_strided_slice %71 {offsets = [0, 80], sizes = [7, 8], strides = [1, 1]} : vector<7x128xf32> to vector<7x8xf32>
    %87 = arith.addf %85, %86 : vector<7x8xf32>
    %88 = vector.extract_strided_slice %71 {offsets = [0, 24], sizes = [7, 8], strides = [1, 1]} : vector<7x128xf32> to vector<7x8xf32>
    %89 = vector.extract_strided_slice %71 {offsets = [0, 56], sizes = [7, 8], strides = [1, 1]} : vector<7x128xf32> to vector<7x8xf32>
    %90 = arith.addf %88, %89 : vector<7x8xf32>
    %91 = vector.extract_strided_slice %71 {offsets = [0, 88], sizes = [7, 8], strides = [1, 1]} : vector<7x128xf32> to vector<7x8xf32>
    %92 = arith.addf %90, %91 : vector<7x8xf32>
    %93 = vector.extract_strided_slice %71 {offsets = [0, 32], sizes = [7, 8], strides = [1, 1]} : vector<7x128xf32> to vector<7x8xf32>
    %94 = vector.extract_strided_slice %71 {offsets = [0, 64], sizes = [7, 8], strides = [1, 1]} : vector<7x128xf32> to vector<7x8xf32>
    %95 = arith.subf %93, %94 : vector<7x8xf32>
    %96 = vector.extract_strided_slice %71 {offsets = [0, 96], sizes = [7, 8], strides = [1, 1]} : vector<7x128xf32> to vector<7x8xf32>
    %97 = arith.subf %95, %96 : vector<7x8xf32>
    %98 = vector.extract_strided_slice %71 {offsets = [0, 40], sizes = [7, 8], strides = [1, 1]} : vector<7x128xf32> to vector<7x8xf32>
    %99 = vector.extract_strided_slice %71 {offsets = [0, 72], sizes = [7, 8], strides = [1, 1]} : vector<7x128xf32> to vector<7x8xf32>
    %100 = arith.subf %98, %99 : vector<7x8xf32>
    %101 = vector.extract_strided_slice %71 {offsets = [0, 104], sizes = [7, 8], strides = [1, 1]} : vector<7x128xf32> to vector<7x8xf32>
    %102 = arith.subf %100, %101 : vector<7x8xf32>
    %103 = vector.extract_strided_slice %71 {offsets = [0, 48], sizes = [7, 8], strides = [1, 1]} : vector<7x128xf32> to vector<7x8xf32>
    %104 = vector.extract_strided_slice %71 {offsets = [0, 80], sizes = [7, 8], strides = [1, 1]} : vector<7x128xf32> to vector<7x8xf32>
    %105 = arith.subf %103, %104 : vector<7x8xf32>
    %106 = vector.extract_strided_slice %71 {offsets = [0, 112], sizes = [7, 8], strides = [1, 1]} : vector<7x128xf32> to vector<7x8xf32>
    %107 = arith.subf %105, %106 : vector<7x8xf32>
    %108 = vector.extract_strided_slice %71 {offsets = [0, 56], sizes = [7, 8], strides = [1, 1]} : vector<7x128xf32> to vector<7x8xf32>
    %109 = vector.extract_strided_slice %71 {offsets = [0, 88], sizes = [7, 8], strides = [1, 1]} : vector<7x128xf32> to vector<7x8xf32>
    %110 = arith.subf %108, %109 : vector<7x8xf32>
    %111 = vector.extract_strided_slice %71 {offsets = [0, 120], sizes = [7, 8], strides = [1, 1]} : vector<7x128xf32> to vector<7x8xf32>
    %112 = arith.subf %110, %111 : vector<7x8xf32>
    %113 = arith.addf %77, %82 : vector<7x8xf32>
    %114 = arith.addf %113, %87 : vector<7x8xf32>
    %115 = vector.broadcast %72 : vector<1x8xf32> to vector<7x8xf32>
    %116 = arith.addf %114, %115 : vector<7x8xf32>
    %c0_13 = arith.constant 0 : index
    %c0_14 = arith.constant 0 : index
    %c0_15 = arith.constant 0 : index
    %c0_16 = arith.constant 0 : index
    %c0_17 = arith.constant 0 : index
    %c0_18 = arith.constant 0 : index
    %117 = vector.load %arg6[%c0_13, %c0_14, %c0_15, %c0_16, %c0_17, %c0_18] : memref<1x1x2x2x7x8xf32, #tpu.memory_space<vmem>>, vector<1x1x1x1x7x8xf32>
    %118 = vector.shape_cast %117 : vector<1x1x1x1x7x8xf32> to vector<7x8xf32>
    %119 = vector.shape_cast %116 : vector<7x8xf32> to vector<1x1x1x1x7x8xf32>
    tpu.vector_store %arg6[%c0_13, %c0_14, %c0_15, %c0_16, %c0_17, %c0_18], %119 {strides = array<i32>} : memref<1x1x2x2x7x8xf32, #tpu.memory_space<vmem>>, vector<1x1x1x1x7x8xf32>,
    %120 = arith.subf %82, %87 : vector<7x8xf32>
    %121 = arith.subf %120, %92 : vector<7x8xf32>
    %122 = vector.broadcast %72 : vector<1x8xf32> to vector<7x8xf32>
    %123 = arith.addf %121, %122 : vector<7x8xf32>
    %c0_19 = arith.constant 0 : index
    %c0_20 = arith.constant 0 : index
    %c0_21 = arith.constant 0 : index
    %c1 = arith.constant 1 : index
    %c0_22 = arith.constant 0 : index
    %c0_23 = arith.constant 0 : index
    %124 = vector.load %arg6[%c0_19, %c0_20, %c0_21, %c1, %c0_22, %c0_23] : memref<1x1x2x2x7x8xf32, #tpu.memory_space<vmem>>, vector<1x1x1x1x7x8xf32>
    %125 = vector.shape_cast %124 : vector<1x1x1x1x7x8xf32> to vector<7x8xf32>
    %126 = vector.shape_cast %123 : vector<7x8xf32> to vector<1x1x1x1x7x8xf32>
    tpu.vector_store %arg6[%c0_19, %c0_20, %c0_21, %c1, %c0_22, %c0_23], %126 {strides = array<i32>} : memref<1x1x2x2x7x8xf32, #tpu.memory_space<vmem>>, vector<1x1x1x1x7x8xf32>,
    %127 = arith.addf %97, %102 : vector<7x8xf32>
    %128 = arith.addf %127, %107 : vector<7x8xf32>
    %129 = vector.broadcast %72 : vector<1x8xf32> to vector<7x8xf32>
    %130 = arith.addf %128, %129 : vector<7x8xf32>
    %c0_24 = arith.constant 0 : index
    %c0_25 = arith.constant 0 : index
    %c1_26 = arith.constant 1 : index
    %c0_27 = arith.constant 0 : index
    %c0_28 = arith.constant 0 : index
    %c0_29 = arith.constant 0 : index
    %131 = vector.load %arg6[%c0_24, %c0_25, %c1_26, %c0_27, %c0_28, %c0_29] : memref<1x1x2x2x7x8xf32, #tpu.memory_space<vmem>>, vector<1x1x1x1x7x8xf32>
    %132 = vector.shape_cast %131 : vector<1x1x1x1x7x8xf32> to vector<7x8xf32>
    %133 = vector.shape_cast %130 : vector<7x8xf32> to vector<1x1x1x1x7x8xf32>
    tpu.vector_store %arg6[%c0_24, %c0_25, %c1_26, %c0_27, %c0_28, %c0_29], %133 {strides = array<i32>} : memref<1x1x2x2x7x8xf32, #tpu.memory_space<vmem>>, vector<1x1x1x1x7x8xf32>,
    %134 = arith.subf %102, %107 : vector<7x8xf32>
    %135 = arith.subf %134, %112 : vector<7x8xf32>
    %136 = vector.broadcast %72 : vector<1x8xf32> to vector<7x8xf32>
    %137 = arith.addf %135, %136 : vector<7x8xf32>
    %c0_30 = arith.constant 0 : index
    %c0_31 = arith.constant 0 : index
    %c1_32 = arith.constant 1 : index
    %c1_33 = arith.constant 1 : index
    %c0_34 = arith.constant 0 : index
    %c0_35 = arith.constant 0 : index
    %138 = vector.load %arg6[%c0_30, %c0_31, %c1_32, %c1_33, %c0_34, %c0_35] : memref<1x1x2x2x7x8xf32, #tpu.memory_space<vmem>>, vector<1x1x1x1x7x8xf32>
    %139 = vector.shape_cast %138 : vector<1x1x1x1x7x8xf32> to vector<7x8xf32>
    %140 = vector.shape_cast %137 : vector<7x8xf32> to vector<1x1x1x1x7x8xf32>
    tpu.vector_store %arg6[%c0_30, %c0_31, %c1_32, %c1_33, %c0_34, %c0_35], %140 {strides = array<i32>} : memref<1x1x2x2x7x8xf32, #tpu.memory_space<vmem>>, vector<1x1x1x1x7x8xf32>,
    return
  }
  func.func @transform_0(%arg0: i32, %arg1: i32) -> (i32, i32, i32, i32, i32) {
    %c0_i32 = arith.constant 0 : i32
    %c0_i32_0 = arith.constant 0 : i32
    %c0_i32_1 = arith.constant 0 : i32
    %c0_i32_2 = arith.constant 0 : i32
    return %arg0, %arg1, %c0_i32, %c0_i32_0, %c0_i32_1 : i32, i32, i32, i32, i32
  }
  func.func @transform_1(%arg0: i32, %arg1: i32) -> (i32, i32, i32, i32, i32) {
    %c1_i32 = arith.constant 1 : i32
    %0 = arith.addi %arg1, %c1_i32 : i32
    %c0_i32 = arith.constant 0 : i32
    %c0_i32_0 = arith.constant 0 : i32
    %c0_i32_1 = arith.constant 0 : i32
    %c0_i32_2 = arith.constant 0 : i32
    return %arg0, %0, %c0_i32, %c0_i32_0, %c0_i32_1 : i32, i32, i32, i32, i32
  }
  func.func @transform_2(%arg0: i32, %arg1: i32) -> (i32, i32) {
    %c0_i32 = arith.constant 0 : i32
    %c0_i32_0 = arith.constant 0 : i32
    %c0_i32_1 = arith.constant 0 : i32
    return %c0_i32, %c0_i32_0 : i32, i32
  }
  func.func @transform_3(%arg0: i32, %arg1: i32) -> (i32, i32) {
    %c0_i32 = arith.constant 0 : i32
    %c0_i32_0 = arith.constant 0 : i32
    %c0_i32_1 = arith.constant 0 : i32
    return %c0_i32, %c0_i32_0 : i32, i32
  }
  func.func @transform_4(%arg0: i32, %arg1: i32) -> (i32, i32, i32, i32, i32, i32) {
    %c0_i32 = arith.constant 0 : i32
    %c0_i32_0 = arith.constant 0 : i32
    %c0_i32_1 = arith.constant 0 : i32
    %c0_i32_2 = arith.constant 0 : i32
    %c0_i32_3 = arith.constant 0 : i32
    return %arg0, %arg1, %c0_i32, %c0_i32_0, %c0_i32_1, %c0_i32_2 : i32, i32, i32, i32, i32, i32
  }
}

</mosaic_0001>

<llo_original>
// kernel: winograd_conv2d.1
$region0: #{winograd_conv2d.1}
  #allocation0 [shape = 'u32[]', space=smem, size = 0x4, offset = 0x4, fixed_abs, tag = 'smem constant byte address 0x4 - core index']
  #allocation1 [shape = 'u32[144,128]{1,0:T(1,128)}', space=vmem, size = 0x12000, scoped, tag = 'internal scratch']
  %s0 = inlined_call_operand.vmem [shape: f32[2,8,4,8,4], index: 0, kind: input, shape index: {}, may-alias: {0,1}]
  %s1 = inlined_call_operand.vmem [shape: f32[2,8,4,8,4], index: 1, kind: input, shape index: {}, may-alias: {0,1}]
  %s2 = inlined_call_operand.vmem [shape: bf16[64,128], index: 2, kind: input, shape index: {}]
  %s3 = inlined_call_operand.vmem [shape: f32[1,8], index: 3, kind: input, shape index: {}]
  %s4 = inlined_call_operand.vmem [shape: f32[2,7,2,2,7,8], index: 4, kind: output, shape index: {}]
  %s5 = sld [smem:[#allocation0]]
  $region49: #{winograd_conv2d.1} parent=0
    _
  %s7 = ssub.s32 1, %s5
  %s8 = scalar_select 0, %s7, %s5
  loop: start=0, step=1, limit=16
  $region2: #{winograd_conv2d.1} parent=0 // loop_pre_header
    _
  $region3: #{winograd_conv2d.1} parent=0 // loop_header
    %s10 = sphi 0, %s14
    %p11 = scmp.ge.s32.totalorder %s10, 16
    %s17 = sphi 0, %s29
    %s18 = sphi 0, %s25
    %s19 = sphi 0, %s17
    %s20 = sphi 0, %s18
    %s21 = sphi 0, %s19
    %s22 = sphi 0, %s20
    %s34 = sphi 0, %s36
    %s37 = sphi 0, %s34
    %s38 = sphi 0, %s37
    %s54 = sphi 0, %s38
    %s64 = sphi 0, %s66
    %s67 = sphi 0, %s64
    %s68 = sphi 0, %s67
    %s84 = sphi 0, %s68
    %s88 = sphi 0, %s88
    %s90 = sphi 0, %s88
    %s91 = sphi 0, %s90
    %s105 = sphi 0, %s91
    %s109 = sphi 0, %s109
    %s111 = sphi 0, %s109
    %s112 = sphi 0, %s111
    %s126 = sphi 0, %s112
    %s134 = sphi 0, %s136
    %s137 = sphi 0, %s134
    %s138 = sphi 0, %s137
    %s154 = sphi 0, %s138
  $region4: #{winograd_conv2d.1} parent=0 // loop_header_branch
    %13 = sbr.rel (%p11) target = $region8
  $region5: #{winograd_conv2d.1} parent=0 // loop_body
    %s15 = ssub.s32 %s10, 1
    %s16 = ssub.s32 %s10, 2
    %s23 = sadd.s32 1, %s18
    %p24 = scmp.ge.s32.totalorder %s23, 7
    %s25 = scalar_select %p24, 0, %s23
    %s26 = sadd.s32 1, %s17
    %s27 = scalar_select %p24, %s26, %s17
    %p28 = scmp.ge.s32.totalorder %s27, 2
    %s29 = scalar_select %p28, 0, %s27
    %s30 = ssub.s32 %s17, %s29
    %s31 = ssub.s32 %s18, %s25
    %s32 = sor.u32 %s30, %s31
    %p33 = scmp.eq.s32.totalorder %s32, 0
    %s35 = sadd.s32 %s34, 1
    %s36 = scalar_select %p33, %s34, %s35
    %p39 = pneg %p33
    %p40 = scmp.eq.s32.totalorder %s10, 13
    %p41 = por %p39, %p40
    %p42 = scmp.ne.s32.totalorder %s34, %s37
    %p43 = scmp.eq.s32.totalorder %s10, 0
    %p44 = por %p42, %p43
    %p45 = scmp.ne.s32.totalorder %s34, %s37
    %p46 = scmp.eq.s32.totalorder %s15, 13
    %p47 = por %p45, %p46
    %p48 = scmp.ne.s32.totalorder %s37, %s38
    %p49 = scmp.eq.s32.totalorder %s15, 0
    %p50 = por %p48, %p49
    %p51 = scmp.ne.s32.totalorder %s37, %s38
    %p52 = scmp.eq.s32.totalorder %s16, 13
    %p53 = por %p51, %p52
    %p55 = scmp.ne.s32.totalorder %s38, %s54
    %p56 = scmp.eq.s32.totalorder %s16, 0
    %p57 = por %p55, %p56
    %s58 = sadd.s32 %s18, 1
    %s59 = sadd.s32 %s25, 1
    %s60 = ssub.s32 %s17, %s29
    %s61 = ssub.s32 %s58, %s59
    %s62 = sor.u32 %s60, %s61
    %p63 = scmp.eq.s32.totalorder %s62, 0
    %s65 = sadd.s32 %s64, 1
    %s66 = scalar_select %p63, %s64, %s65
    %p69 = pneg %p63
    %p70 = scmp.eq.s32.totalorder %s10, 13
    %p71 = por %p69, %p70
    %p72 = scmp.ne.s32.totalorder %s64, %s67
    %p73 = scmp.eq.s32.totalorder %s10, 0
    %p74 = por %p72, %p73
    %p75 = scmp.ne.s32.totalorder %s64, %s67
    %p76 = scmp.eq.s32.totalorder %s15, 13
    %p77 = por %p75, %p76
    %p78 = scmp.ne.s32.totalorder %s67, %s68
    %p79 = scmp.eq.s32.totalorder %s15, 0
    %p80 = por %p78, %p79
    %p81 = scmp.ne.s32.totalorder %s67, %s68
    %p82 = scmp.eq.s32.totalorder %s16, 13
    %p83 = por %p81, %p82
    %p85 = scmp.ne.s32.totalorder %s68, %s84
    %p86 = scmp.eq.s32.totalorder %s16, 0
    %p87 = por %p85, %p86
    %s89 = sadd.s32 %s88, 1
    %p92 = scmp.eq.s32.totalorder %s10, 13
    %p93 = scmp.ne.s32.totalorder %s88, %s90
    %p94 = scmp.eq.s32.totalorder %s10, 0
    %p95 = por %p93, %p94
    %p96 = scmp.ne.s32.totalorder %s88, %s90
    %p97 = scmp.eq.s32.totalorder %s15, 13
    %p98 = por %p96, %p97
    %p99 = scmp.ne.s32.totalorder %s90, %s91
    %p100 = scmp.eq.s32.totalorder %s15, 0
    %p101 = por %p99, %p100
    %p102 = scmp.ne.s32.totalorder %s90, %s91
    %p103 = scmp.eq.s32.totalorder %s16, 13
    %p104 = por %p102, %p103
    %p106 = scmp.ne.s32.totalorder %s91, %s105
    %p107 = scmp.eq.s32.totalorder %s16, 0
    %p108 = por %p106, %p107
    %s110 = sadd.s32 %s109, 1
    %p113 = scmp.eq.s32.totalorder %s10, 13
    %p114 = scmp.ne.s32.totalorder %s109, %s111
    %p115 = scmp.eq.s32.totalorder %s10, 0
    %p116 = por %p114, %p115
    %p117 = scmp.ne.s32.totalorder %s109, %s111
    %p118 = scmp.eq.s32.totalorder %s15, 13
    %p119 = por %p117, %p118
    %p120 = scmp.ne.s32.totalorder %s111, %s112
    %p121 = scmp.eq.s32.totalorder %s15, 0
    %p122 = por %p120, %p121
    %p123 = scmp.ne.s32.totalorder %s111, %s112
    %p124 = scmp.eq.s32.totalorder %s16, 13
    %p125 = por %p123, %p124
    %p127 = scmp.ne.s32.totalorder %s112, %s126
    %p128 = scmp.eq.s32.totalorder %s16, 0
    %p129 = por %p127, %p128
    %s130 = ssub.s32 %s17, %s29
    %s131 = ssub.s32 %s18, %s25
    %s132 = sor.u32 %s130, %s131
    %p133 = scmp.eq.s32.totalorder %s132, 0
    %s135 = sadd.s32 %s134, 1
    %s136 = scalar_select %p133, %s134, %s135
    %p139 = pneg %p133
    %p140 = scmp.eq.s32.totalorder %s10, 13
    %p141 = por %p139, %p140
    %p142 = scmp.ne.s32.totalorder %s134, %s137
    %p143 = scmp.eq.s32.totalorder %s10, 0
    %p144 = por %p142, %p143
    %p145 = scmp.ne.s32.totalorder %s134, %s137
    %p146 = scmp.eq.s32.totalorder %s15, 13
    %p147 = por %p145, %p146
    %p148 = scmp.ne.s32.totalorder %s137, %s138
    %p149 = scmp.eq.s32.totalorder %s15, 0
    %p150 = por %p148, %p149
    %p151 = scmp.ne.s32.totalorder %s137, %s138
    %p152 = scmp.eq.s32.totalorder %s16, 13
    %p153 = por %p151, %p152
    %p155 = scmp.ne.s32.totalorder %s138, %s154
    %p156 = scmp.eq.s32.totalorder %s16, 0
    %p157 = por %p155, %p156
    %p158 = scmp.le.s32.totalorder 1, %s10
    %p159 = scmp.lt.s32.totalorder %s10, 15
    %p160 = pnand %p158, %p159
    %p161 = pneg %p160
    // Predicated region
    $region9: #{winograd_conv2d.1} parent=5 // pred_check
      _
    $region10: #{winograd_conv2d.1} parent=5 // pred_check_branch
      %163 = sbr.rel (%p160) target = $region12
    $region11: #{winograd_conv2d.1} parent=5 // pred_region
      %s164 = ssub.s32 %s10, 1
      // Predicated region
      $region13: #{winograd_conv2d.1} parent=11 // pred_check
        %p165 = pneg %p101
      $region14: #{winograd_conv2d.1} parent=11 // pred_check_branch
        %167 = sbr.rel (%p165) target = $region16
      $region15: #{winograd_conv2d.1} parent=11 // pred_region
        _
      $region16: #{winograd_conv2d.1} parent=11 // pred_fallthru
        _
      // Predicated region
      $region17: #{winograd_conv2d.1} parent=11 // pred_check
        %p168 = pneg %p122
      $region18: #{winograd_conv2d.1} parent=11 // pred_check_branch
        %170 = sbr.rel (%p168) target = $region20
      $region19: #{winograd_conv2d.1} parent=11 // pred_region
        _
      $region20: #{winograd_conv2d.1} parent=11 // pred_fallthru
        _
    $region12: #{winograd_conv2d.1} parent=5 // pred_fallthru
      _
    %p171 = scmp.lt.s32.totalorder %s10, 14
    // Predicated region
    $region21: #{winograd_conv2d.1} parent=5 // pred_check
      %p172 = pneg %p171
    $region22: #{winograd_conv2d.1} parent=5 // pred_check_branch
      %174 = sbr.rel (%p172) target = $region24
    $region23: #{winograd_conv2d.1} parent=5 // pred_region
      // Predicated region
      $region25: #{winograd_conv2d.1} parent=23 // pred_check
        %p175 = pneg %p44
      $region26: #{winograd_conv2d.1} parent=23 // pred_check_branch
        %177 = sbr.rel (%p175) target = $region28
      $region27: #{winograd_conv2d.1} parent=23 // pred_region
        %p178 = scmp.lt.s32.totalorder %s17, 1
        %s179 = scalar_select %p178, %s17, 1
        %p180 = scmp.lt.s32.totalorder %s18, 7
        %s181 = scalar_select %p180, %s18, 7
        %s182 = smul.addr %s181, 4
        %s183 = smul.addr %s179, 32
        %s184 = sadd.s32 %s182, %s183
        %s185 = smul.addr %s184, 8
        %s186 = scalar_lea.vmem %s0, %s185
      $region28: #{winograd_conv2d.1} parent=23 // pred_fallthru
        _
      // Predicated region
      $region29: #{winograd_conv2d.1} parent=23 // pred_check
        %p187 = pneg %p74
      $region30: #{winograd_conv2d.1} parent=23 // pred_check_branch
        %189 = sbr.rel (%p187) target = $region32
      $region31: #{winograd_conv2d.1} parent=23 // pred_region
        %s190 = sadd.s32 %s18, 1
        %p191 = scmp.lt.s32.totalorder %s17, 1
        %s192 = scalar_select %p191, %s17, 1
        %p193 = scmp.lt.s32.totalorder %s190, 7
        %s194 = scalar_select %p193, %s190, 7
        %s195 = smul.addr %s194, 4
        %s196 = smul.addr %s192, 32
        %s197 = sadd.s32 %s195, %s196
        %s198 = smul.addr %s197, 8
        %s199 = scalar_lea.vmem %s1, %s198
        %s200 = sadd.s32 %s18, 1
      $region32: #{winograd_conv2d.1} parent=23 // pred_fallthru
        _
    $region24: #{winograd_conv2d.1} parent=5 // pred_fallthru
      _
    %p201 = scmp.le.s32.totalorder 1, %s10
    %p202 = scmp.lt.s32.totalorder %s10, 15
    %p203 = pnand %p201, %p202
    %p204 = pneg %p203
    // Predicated region
    $region33: #{winograd_conv2d.1} parent=5 // pred_check
      _
    $region34: #{winograd_conv2d.1} parent=5 // pred_check_branch
      %206 = sbr.rel (%p203) target = $region36
    $region35: #{winograd_conv2d.1} parent=5 // pred_region
      %s207 = ssub.s32 %s10, 1
      %p208 = scmp.lt.s32.totalorder %s19, 1
      %s209 = scalar_select %p208, %s19, 1
      %p210 = scmp.lt.s32.totalorder %s20, 7
      %s211 = scalar_select %p210, %s20, 7
      %s212 = smul.addr %s211, 4
      %s213 = smul.addr %s209, 32
      %s214 = sadd.s32 %s212, %s213
      %s215 = smul.addr %s214, 8
      %s216 = scalar_lea.vmem %s0, %s215
      %p217 = pneg %p50
      %p218 = pneg %p47
      %s219 = sadd.s32 %s20, 1
      %p220 = scmp.lt.s32.totalorder %s19, 1
      %s221 = scalar_select %p220, %s19, 1
      %p222 = scmp.lt.s32.totalorder %s219, 7
      %s223 = scalar_select %p222, %s219, 7
      %s224 = smul.addr %s223, 4
      %s225 = smul.addr %s221, 32
      %s226 = sadd.s32 %s224, %s225
      %s227 = smul.addr %s226, 8
      %s228 = scalar_lea.vmem %s1, %s227
      %p229 = pneg %p80
      %p230 = pneg %p77
      %p231 = pneg %p101
      %p232 = pneg %p98
      %p233 = pneg %p122
      %p234 = pneg %p119
      %p235 = pneg %p150
      %p236 = pneg %p147
      %p237 = scmp.lt.s32.totalorder %s19, 1
      %s238 = scalar_select %p237, %s19, 1
      %p239 = scmp.lt.s32.totalorder %s20, 6
      %s240 = scalar_select %p239, %s20, 6
      %s241 = smul.addr %s240, 4
      %s242 = smul.addr %s238, 28
      %s243 = sadd.s32 %s241, %s242
      %s244 = smul.addr %s243, 8
      %s245 = scalar_lea.vmem %s4, %s244
      %p246 = scmp.lt.s32.totalorder %s19, 1
      %s247 = scalar_select %p246, %s19, 1
      %p248 = scmp.lt.s32.totalorder %s20, 7
      %s249 = scalar_select %p248, %s20, 7
      %s250 = smul.addr %s249, 4
      %s251 = smul.addr %s247, 32
      %s252 = sadd.s32 %s250, %s251
      %s253 = smul.addr %s252, 8
      %s254 = scalar_lea.vmem %s0, %s253
      %s255 = sadd.s32 %s20, 1
      %p256 = scmp.lt.s32.totalorder %s19, 1
      %s257 = scalar_select %p256, %s19, 1
      %p258 = scmp.lt.s32.totalorder %s255, 7
      %s259 = scalar_select %p258, %s255, 7
      %s260 = smul.addr %s259, 4
      %s261 = smul.addr %s257, 32
      %s262 = sadd.s32 %s260, %s261
      %s263 = smul.addr %s262, 8
      %s264 = scalar_lea.vmem %s1, %s263
      %s265 = sadd.s32 %s20, 1
      %p266 = scmp.lt.s32.totalorder %s19, 1
      %s267 = scalar_select %p266, %s19, 1
      %p268 = scmp.lt.s32.totalorder %s20, 6
      %s269 = scalar_select %p268, %s20, 6
      %s270 = smul.addr %s269, 4
      %s271 = smul.addr %s267, 28
      %s272 = sadd.s32 %s270, %s271
      %s273 = smul.addr %s272, 8
      %s274 = scalar_lea.vmem %s4, %s273
      %v276 = vld [vmem:[%s254] sm:$0xff]
      %v277 = vld [vmem:[%s254 + $0x8] sm:$0xff]
      %v278 = vld [vmem:[%s254 + $0x10] sm:$0xff]
      %v279 = vld [vmem:[%s254 + $0x18] sm:$0xff]
      %v280 = vld [vmem:[%s264] sm:$0xff]
      %v281 = vld [vmem:[%s264 + $0x8] sm:$0xff]
      %v282 = vld [vmem:[%s264 + $0x10] sm:$0xff]
      %v283 = vld [vmem:[%s264 + $0x18] sm:$0xff]
      %v284 = vsub.f32 %v276, %v280
      %v285 = vadd.f32 %v278, %v280
      %v286 = vsub.f32 %v280, %v278
      %v287 = vsub.f32 %v278, %v282
      %v288 = vsub.f32 %v277, %v281
      %v289 = vadd.f32 %v279, %v281
      %v290 = vsub.f32 %v281, %v279
      %v291 = vsub.f32 %v279, %v283
      %v293 = vrot.slane %v284, 1
      %v295 = vsub.f32 %v284, %v293
      %v296 = vadd.f32 %v288, %v293
      %v298 = vrot.slane %v288, 7
      %v300 = vsub.f32 %v284, %v298
      %v301 = vrot.slane %v288, 1
      %v303 = vsub.f32 %v288, %v301
      %v305 = vrot.slane %v285, 1
      %v307 = vsub.f32 %v285, %v305
      %v308 = vadd.f32 %v289, %v305
      %v310 = vrot.slane %v289, 7
      %v312 = vsub.f32 %v285, %v310
      %v313 = vrot.slane %v289, 1
      %v315 = vsub.f32 %v289, %v313
      %v317 = vrot.slane %v286, 1
      %v319 = vsub.f32 %v286, %v317
      %v320 = vadd.f32 %v290, %v317
      %v322 = vrot.slane %v290, 7
      %v324 = vsub.f32 %v286, %v322
      %v325 = vrot.slane %v290, 1
      %v327 = vsub.f32 %v290, %v325
      %v329 = vrot.slane %v287, 1
      %v331 = vsub.f32 %v287, %v329
      %v332 = vadd.f32 %v291, %v329
      %v334 = vrot.slane %v291, 7
      %v336 = vsub.f32 %v287, %v334
      %v337 = vrot.slane %v291, 1
      %v339 = vsub.f32 %v291, %v337
      %341 = vrot.lane.b32.xlu0 %v296, 4
      %v342 = vpop.permute.xlu0 %341
      %v345 = vrot.slane %v300, 1
      %346 = vrot.lane.b32.xlu0 %v345, 8
      %v347 = vpop.permute.xlu0 %346
      %350 = vrot.lane.b32.xlu0 %v303, 12
      %v351 = vpop.permute.xlu0 %350
      %354 = vrot.lane.b32.xlu0 %v307, 16
      %v355 = vpop.permute.xlu0 %354
      %358 = vrot.lane.b32.xlu0 %v308, 20
      %v359 = vpop.permute.xlu0 %358
      %v362 = vrot.slane %v312, 1
      %363 = vrot.lane.b32.xlu0 %v362, 24
      %v364 = vpop.permute.xlu0 %363
      %367 = vrot.lane.b32.xlu0 %v315, 28
      %v368 = vpop.permute.xlu0 %367
      %371 = vrot.lane.b32.xlu0 %v319, 32
      %v372 = vpop.permute.xlu0 %371
      %375 = vrot.lane.b32.xlu0 %v320, 36
      %v376 = vpop.permute.xlu0 %375
      %v379 = vrot.slane %v324, 1
      %380 = vrot.lane.b32.xlu0 %v379, 40
      %v381 = vpop.permute.xlu0 %380
      %384 = vrot.lane.b32.xlu0 %v327, 44
      %v385 = vpop.permute.xlu0 %384
      %388 = vrot.lane.b32.xlu0 %v331, 48
      %v389 = vpop.permute.xlu0 %388
      %392 = vrot.lane.b32.xlu0 %v332, 52
      %v393 = vpop.permute.xlu0 %392
      %v396 = vrot.slane %v336, 1
      %397 = vrot.lane.b32.xlu0 %v396, 56
      %v398 = vpop.permute.xlu0 %397
      %401 = vrot.lane.b32.xlu0 %v339, 60
      %v402 = vpop.permute.xlu0 %401
      %vm404 = vcmask 31744
      %v405 = vsel %vm404, %v295, %v342
      %vm406 = vcmask 64512
      %v407 = vsel %vm406, %v405, %v347
      %vm408 = vcmask 97280
      %v409 = vsel %vm408, %v407, %v351
      %vm410 = vcmask 130048
      %v411 = vsel %vm410, %v409, %v355
      %vm412 = vcmask 162816
      %v413 = vsel %vm412, %v411, %v359
      %vm414 = vcmask 195584
      %v415 = vsel %vm414, %v413, %v364
      %vm416 = vcmask 228352
      %v417 = vsel %vm416, %v415, %v368
      %vm418 = vcmask 261120
      %v419 = vsel %vm418, %v417, %v372
      %vm420 = vcmask 293888
      %v421 = vsel %vm420, %v419, %v376
      %vm422 = vcmask 326656
      %v423 = vsel %vm422, %v421, %v381
      %vm424 = vcmask 359424
      %v425 = vsel %vm424, %v423, %v385
      %vm426 = vcmask 392192
      %v427 = vsel %vm426, %v425, %v389
      %vm428 = vcmask 424960
      %v429 = vsel %vm428, %v427, %v393
      %vm430 = vcmask 457728
      %v431 = vsel %vm430, %v429, %v398
      %vm432 = vcmask 490496
      %v433 = vsel %vm432, %v431, %v402
      %v434 = vpack.c.bf16 %v433, %v433
      %v435 = vld [vmem:[%s2] sm:$0xf]
      %v436 = vld [vmem:[%s2 + $0x4] sm:$0xf]
      %v437 = vld [vmem:[%s2 + $0x8] sm:$0xf]
      %v438 = vld [vmem:[%s2 + $0xc] sm:$0xf]
      %v439 = vld [vmem:[%s2 + $0x10] sm:$0xf]
      %v440 = vld [vmem:[%s2 + $0x14] sm:$0xf]
      %v441 = vld [vmem:[%s2 + $0x18] sm:$0xf]
      %v442 = vld [vmem:[%s2 + $0x1c] sm:$0xf]
      %v451 = vunpack.c.l.b16 %v435
      %v452 = vunpack.c.l.b16 %v436
      %v453 = vunpack.c.l.b16 %v437
      %v454 = vunpack.c.l.b16 %v438
      %v455 = vunpack.c.l.b16 %v439
      %v456 = vunpack.c.l.b16 %v440
      %v457 = vunpack.c.l.b16 %v441
      %v458 = vunpack.c.l.b16 %v442
      %v459 = vpack.c.b16 %v452, %v451
      %v460 = vpack.c.b16 %v454, %v453
      %v461 = vpack.c.b16 %v456, %v455
      %v462 = vpack.c.b16 %v458, %v457
      %vm467 = vcmask 523264
      %v469 = vsel %vm467, %v434, 0
      %471 = vmatprep.subr.bf16.mxu0 0
      %472 = vmatpush1.bf16.msra.mxu0 %v459
      %473 = vmatprep.subr.bf16.mxu0 0
      %474 = vmatpush1.bf16.msra.mxu0 %v460
      %475 = vmatprep.subr.bf16.mxu0 0
      %476 = vmatpush1.bf16.msra.mxu0 %v461
      %477 = vmatprep.subr.bf16.mxu0 0
      %478 = vmatpush1.bf16.msra.mxu0 %v462
      %479 = vmatprep.subr.bf16.mxu0 0
      %480 = vmatpush1.bf16.msra.mxu0 0
      %481 = vmatprep.subr.bf16.mxu0 0
      %482 = vmatpush1.bf16.msra.mxu0 0
      %483 = vmatprep.subr.bf16.mxu0 0
      %484 = vmatpush1.bf16.msra.mxu0 0
      %485 = vmatprep.subr.bf16.mxu0 0
      %486 = vmatpush1.bf16.msra.mxu0 0
      %487 = vmatprep.subr.bf16.mxu0 0
      %488 = vmatpush1.bf16.msra.mxu0 0
      %489 = vmatprep.subr.bf16.mxu0 0
      %490 = vmatpush1.bf16.msra.mxu0 0
      %491 = vmatprep.subr.bf16.mxu0 0
      %492 = vmatpush1.bf16.msra.mxu0 0
      %493 = vmatprep.subr.bf16.mxu0 0
      %494 = vmatpush1.bf16.msra.mxu0 0
      %495 = vmatprep.subr.bf16.mxu0 0
      %496 = vmatpush1.bf16.msra.mxu0 0
      %497 = vmatprep.subr.bf16.mxu0 0
      %498 = vmatpush1.bf16.msra.mxu0 0
      %499 = vmatprep.subr.bf16.mxu0 0
      %500 = vmatpush1.bf16.msra.mxu0 0
      %501 = vmatprep.subr.bf16.mxu0 0
      %502 = vmatpush1.bf16.msra.mxu0 0
      %503 = vmatprep.mubr.bf16.mxu0 0
      %504 = vmatmul.mubr.bf16.gmra.mrb[0].mxu0 %v469
      %v505 = vpop.f32.mrb[0].mxu0
      %v506 = vadd.f32 0.0, %v505
      %v507 = vpop.f32.mrb[0].mxu0
      %v508 = vpop.f32.mrb[0].mxu0
      %v509 = vpop.f32.mrb[0].mxu0
      %510 = vdwg.mxu0
      %v511 = vld [vmem:[%s3] sm:$0x1]
      %513 = vrot.lane.b32.xlu0 %v506, 96
      %v514 = vpop.permute.xlu0 %513
      %v516 = vadd.f32 %v506, %v514
      %517 = vrot.lane.b32.xlu0 %v506, 64
      %v518 = vpop.permute.xlu0 %517
      %v520 = vadd.f32 %v516, %v518
      %v521 = vsub.f32 %v506, %v514
      %v522 = vsub.f32 %v521, %v518
      %524 = vrot.lane.b32.xlu0 %v520, 120
      %v525 = vpop.permute.xlu0 %524
      %v527 = vadd.f32 %v520, %v525
      %528 = vrot.lane.b32.xlu0 %v520, 112
      %v529 = vpop.permute.xlu0 %528
      %v531 = vadd.f32 %v527, %v529
      %v533 = vlaneseq
      %v534 = vshrl.u32 %v533, 7
      %v535 = vsub.s32 0, %v534
      %v536 = vrot.slane %v511, %v535
      %v538 = vadd.f32 %v531, %v536
      %vm539 = vcmask 63488
      %540 = vst.msk [vmem:[%s274] sm:$0x7f] %vm539, %v538
      %v541 = vsub.f32 %v520, %v525
      %v542 = vsub.f32 %v541, %v529
      %543 = vrot.lane.b32.xlu0 %v536, 8
      %v544 = vpop.permute.xlu0 %543
      %v546 = vadd.f32 %v542, %v544
      %548 = vrot.lane.b32.xlu0 %v546, 120
      %v549 = vpop.permute.xlu0 %548
      %s551 = scalar_lea.vmem %s274, 8
      %552 = vst.msk [vmem:[%s551] sm:$0x7f] %vm539, %v549
      %554 = vrot.lane.b32.xlu0 %v522, 120
      %v555 = vpop.permute.xlu0 %554
      %v557 = vadd.f32 %v522, %v555
      %558 = vrot.lane.b32.xlu0 %v522, 112
      %v559 = vpop.permute.xlu0 %558
      %v561 = vadd.f32 %v557, %v559
      %562 = vrot.lane.b32.xlu0 %v536, 32
      %v563 = vpop.permute.xlu0 %562
      %v565 = vadd.f32 %v561, %v563
      %567 = vrot.lane.b32.xlu0 %v565, 96
      %v568 = vpop.permute.xlu0 %567
      %s570 = scalar_lea.vmem %s274, 16
      %571 = vst.msk [vmem:[%s570] sm:$0x7f] %vm539, %v568
      %v572 = vsub.f32 %v522, %v555
      %v573 = vsub.f32 %v572, %v559
      %574 = vrot.lane.b32.xlu0 %v536, 40
      %v575 = vpop.permute.xlu0 %574
      %v577 = vadd.f32 %v573, %v575
      %579 = vrot.lane.b32.xlu0 %v577, 88
      %v580 = vpop.permute.xlu0 %579
      %s582 = scalar_lea.vmem %s274, 24
      %583 = vst.msk [vmem:[%s582] sm:$0x7f] %vm539, %v580
      %p584 = scmp.lt.s32.totalorder %s19, 1
      %s585 = scalar_select %p584, %s19, 1
      %p586 = scmp.lt.s32.totalorder %s20, 6
      %s587 = scalar_select %p586, %s20, 6
      %s588 = smul.addr %s587, 4
      %s589 = smul.addr %s585, 28
      %s590 = sadd.s32 %s588, %s589
      %s591 = smul.addr %s590, 8
      %s592 = scalar_lea.vmem %s4, %s591
      // Predicated region
      $region37: #{winograd_conv2d.1} parent=35 // pred_check
        %p593 = pneg %p147
      $region38: #{winograd_conv2d.1} parent=35 // pred_check_branch
        %595 = sbr.rel (%p593) target = $region40
      $region39: #{winograd_conv2d.1} parent=35 // pred_region
        _
      $region40: #{winograd_conv2d.1} parent=35 // pred_fallthru
        _
    $region36: #{winograd_conv2d.1} parent=5 // pred_fallthru
      _
    %p596 = scmp.le.s32.totalorder 2, %s10
    // Predicated region
    $region41: #{winograd_conv2d.1} parent=5 // pred_check
      %p597 = pneg %p596
    $region42: #{winograd_conv2d.1} parent=5 // pred_check_branch
      %599 = sbr.rel (%p597) target = $region44
    $region43: #{winograd_conv2d.1} parent=5 // pred_region
      %s600 = ssub.s32 %s10, 2
      // Predicated region
      $region45: #{winograd_conv2d.1} parent=43 // pred_check
        %p601 = pneg %p153
      $region46: #{winograd_conv2d.1} parent=43 // pred_check_branch
        %603 = sbr.rel (%p601) target = $region48
      $region47: #{winograd_conv2d.1} parent=43 // pred_region
        %p604 = scmp.lt.s32.totalorder %s21, 1
        %s605 = scalar_select %p604, %s21, 1
        %p606 = scmp.lt.s32.totalorder %s22, 6
        %s607 = scalar_select %p606, %s22, 6
        %s608 = smul.addr %s607, 4
        %s609 = smul.addr %s605, 28
        %s610 = sadd.s32 %s608, %s609
        %s611 = smul.addr %s610, 8
        %s612 = scalar_lea.vmem %s4, %s611
      $region48: #{winograd_conv2d.1} parent=43 // pred_fallthru
        _
    $region44: #{winograd_conv2d.1} parent=5 // pred_fallthru
      _
  $region6: #{winograd_conv2d.1} parent=0 // loop_footer
    %s14 = sadd.s32 1, %s10
  $region7: #{winograd_conv2d.1} parent=0 // loop_footer_branch
    %9 = sbr.rel target = $region3
  $region8: #{winograd_conv2d.1} parent=0 // loop_exit
    _

</llo_original>
